<compile_context>
chip_gen: v6e
topology: v6e:2x2x1
jax: 0.10.0
libtpu: 0.0.40
codegen_flags: <defaults>
</compile_context>

<pallas_src>
import functools

import jax
import jax.numpy as jnp
from jax.experimental import pallas as pl
from jax.experimental.pallas import tpu as pltpu

LAYER_DIMS = [(84, 256), (256, 128), (128, 128), (128, 64), (64, 32), (32, 7)]
IN_PAD = 128      # fc1 contraction dim padded 84 -> 128 (lane aligned)
OUT_PAD = 128     # fc6 output dim padded 7 -> 128 (lane-dense stores)
TILE_B_MAX = 512  # batch tile sized against the v7x 64 MiB VMEM budget


def _round_up(n, m):
    return ((n + m - 1) // m) * m


def _mlp_kernel(x_ref,
                w1, b1, w2, b2, w3, b3, w4, b4, w5, b5, w6, b6,
                o_ref):
    # Straight-line layer chain: bias refs are read exactly once each (no loop,
    # so no repeated broadcast_in_dim emission). Matmuls run on the MXU with
    # bf16 inputs and f32 accumulation; bias-add / ReLU stay in f32 on the VPU.
    h = x_ref[...]  # bf16 [TILE_B, 128]
    h = jnp.maximum(jnp.dot(h, w1[...], preferred_element_type=jnp.float32) + b1[...], 0.0)
    h = jnp.maximum(jnp.dot(h.astype(jnp.bfloat16), w2[...],
                            preferred_element_type=jnp.float32) + b2[...], 0.0)
    h = jnp.maximum(jnp.dot(h.astype(jnp.bfloat16), w3[...],
                            preferred_element_type=jnp.float32) + b3[...], 0.0)
    h = jnp.maximum(jnp.dot(h.astype(jnp.bfloat16), w4[...],
                            preferred_element_type=jnp.float32) + b4[...], 0.0)
    h = jnp.maximum(jnp.dot(h.astype(jnp.bfloat16), w5[...],
                            preferred_element_type=jnp.float32) + b5[...], 0.0)
    # fc6: no ReLU; result written into a lane-dense (TILE_B, 128) block.
    h = jnp.dot(h.astype(jnp.bfloat16), w6[...],
                preferred_element_type=jnp.float32) + b6[...]
    o_ref[...] = h.astype(o_ref.dtype)


def connect4net_forward(x, params):
    """x: [B, 84] f32; params: list of (w [in,out] f32, b [out] or [1,out] f32)."""
    B, F = x.shape
    assert F == 84

    tile_b = min(TILE_B_MAX, _round_up(B, 8))
    b_pad = _round_up(B, tile_b)

    # Pad + cast inputs / params once in the wrapper (done under jit, cheap).
    x_p = jnp.zeros((b_pad, IN_PAD), jnp.bfloat16).at[:B, :F].set(
        x.astype(jnp.bfloat16))

    flat = []
    n_layers = len(params)
    for idx, (w, b) in enumerate(params):
        w = w.astype(jnp.bfloat16)
        b = b.astype(jnp.float32).reshape(1, -1)
        if idx == 0:  # pad contraction dim 84 -> 128 with zero rows
            w = jnp.zeros((IN_PAD, w.shape[1]), jnp.bfloat16).at[:LAYER_DIMS[0][0], :].set(w)
        if idx == n_layers - 1:  # pad output dim 7 -> 128 with zero columns
            w = jnp.zeros((w.shape[0], OUT_PAD), jnp.bfloat16).at[:, :LAYER_DIMS[-1][1]].set(w)
            b = jnp.zeros((1, OUT_PAD), jnp.float32).at[:, :LAYER_DIMS[-1][1]].set(b)
        flat.extend([w, b])

    grid = (b_pad // tile_b,)
    resident = lambda i: (0, 0)  # weights/biases: same block every step -> DMA'd once
    in_specs = [pl.BlockSpec((tile_b, IN_PAD), lambda i: (i, 0))]
    for a in flat:
        in_specs.append(pl.BlockSpec(a.shape, resident))
    out_specs = pl.BlockSpec((tile_b, OUT_PAD), lambda i: (i, 0))

    # Advisory cost estimate (padded dims).
    flops = 2 * b_pad * sum(
        (IN_PAD if i == 0 else din) * (OUT_PAD if i == n_layers - 1 else dout)
        for i, (din, dout) in enumerate(LAYER_DIMS))
    bytes_accessed = (x_p.size * x_p.dtype.itemsize
                      + sum(a.size * a.dtype.itemsize for a in flat)
                      + b_pad * OUT_PAD * 4)
    cost = pl.CostEstimate(flops=flops, transcendentals=0,
                           bytes_accessed=bytes_accessed)

    out_p = pl.pallas_call(
        _mlp_kernel,
        out_shape=jax.ShapeDtypeStruct((b_pad, OUT_PAD), jnp.float32),
        grid=grid,
        in_specs=in_specs,
        out_specs=out_specs,
        compiler_params=pltpu.CompilerParams(
            dimension_semantics=("parallel",)),
        cost_estimate=cost,
    )(x_p, *flat)

    return out_p[:B, :LAYER_DIMS[-1][1]]


def init_params(key):
    """Deterministic init mimicking nn.Linear's default U(-1/sqrt(fan_in), +1/sqrt(fan_in))."""
    params = []
    for (fan_in, fan_out) in LAYER_DIMS:
        key, kw, kb = jax.random.split(key, 3)
        bound = 1.0 / jnp.sqrt(fan_in)
        w = jax.random.uniform(kw, (fan_in, fan_out), jnp.float32, -bound, bound)
        b = jax.random.uniform(kb, (1, fan_out), jnp.float32, -bound, bound)
        params.append((w, b))
    return params


def reference_forward_f32(x, params):
    """Pure-f32 reference (matches the PyTorch module's math)."""
    h = x
    for i, (w, b) in enumerate(params):
        h = h @ w + b
        if i < len(params) - 1:
            h = jnp.maximum(h, 0.0)
    return h


def reference_forward_bf16(x, params):
    """Reference mirroring the kernel's numerics: bf16 dot inputs, f32 accumulate."""
    h = x
    for i, (w, b) in enumerate(params):
        h = jnp.dot(h.astype(jnp.bfloat16), w.astype(jnp.bfloat16),
                    preferred_element_type=jnp.float32) + b
        if i < len(params) - 1:
            h = jnp.maximum(h, 0.0)
    return h


if __name__ == "__main__":
    key = jax.random.PRNGKey(0)
    key, kx = jax.random.split(key)
    params = init_params(key)

    fwd = jax.jit(connect4net_forward)

    # Small demo batch (sublane-aligned): single grid step.
    B = 8
    x = jax.random.uniform(kx, (B, 84), jnp.float32, 0.0, 1.0)  # board features (2*6*7)
    out = jax.block_until_ready(fwd(x, params))
    assert out.shape == (B, 7)
    ref_bf16 = reference_forward_bf16(x, params)
    ref_f32 = reference_forward_f32(x, params)
    assert jnp.allclose(out, ref_bf16, atol=1e-3, rtol=1e-3), "mismatch vs bf16-matched reference"
    assert jnp.allclose(out, ref_f32, atol=5e-2, rtol=5e-2), "mismatch vs f32 reference"

    # Larger batch: exercises multi-step grid, batch padding and output slicing.
    B2 = 600
    key, kx2 = jax.random.split(key)
    x2 = jax.random.uniform(kx2, (B2, 84), jnp.float32, 0.0, 1.0)
    out2 = jax.block_until_ready(fwd(x2, params))
    assert out2.shape == (B2, 7)
    ref2 = reference_forward_bf16(x2, params)
    assert jnp.allclose(out2, ref2, atol=1e-3, rtol=1e-3), "mismatch vs bf16-matched reference (B=600)"

    print("KERNEL_OK")
</pallas_src>

<mosaic_0001>
module attributes {stable_mosaic.version = 11 : i64} {
  func.func @_mlp_kernel(%arg0: i32, %arg1: memref<8x128xbf16, #tpu.memory_space<vmem>>, %arg2: memref<128x256xbf16, #tpu.memory_space<vmem>>, %arg3: memref<1x256xf32, #tpu.memory_space<vmem>>, %arg4: memref<256x128xbf16, #tpu.memory_space<vmem>>, %arg5: memref<1x128xf32, #tpu.memory_space<vmem>>, %arg6: memref<128x128xbf16, #tpu.memory_space<vmem>>, %arg7: memref<1x128xf32, #tpu.memory_space<vmem>>, %arg8: memref<128x64xbf16, #tpu.memory_space<vmem>>, %arg9: memref<1x64xf32, #tpu.memory_space<vmem>>, %arg10: memref<64x32xbf16, #tpu.memory_space<vmem>>, %arg11: memref<1x32xf32, #tpu.memory_space<vmem>>, %arg12: memref<32x128xbf16, #tpu.memory_space<vmem>>, %arg13: memref<1x128xf32, #tpu.memory_space<vmem>>, %arg14: memref<8x128xf32, #tpu.memory_space<vmem>>) attributes {dimension_semantics = [#tpu.dimension_semantics<parallel>], iteration_bounds = array<i64: 1>, scalar_prefetch = 0 : i64, scratch_operands = 0 : i64, tpu.core_type = #tpu.core_type<tc>, window_params = [{transform_indices = @transform_0, window_bounds = array<i64: 8, 128>}, {pipeline_mode = #tpu.pipeline_mode<synchronous>, transform_indices = @transform_1, window_bounds = array<i64: 128, 256>}, {pipeline_mode = #tpu.pipeline_mode<synchronous>, transform_indices = @transform_2, window_bounds = array<i64: 1, 256>}, {pipeline_mode = #tpu.pipeline_mode<synchronous>, transform_indices = @transform_3, window_bounds = array<i64: 256, 128>}, {pipeline_mode = #tpu.pipeline_mode<synchronous>, transform_indices = @transform_4, window_bounds = array<i64: 1, 128>}, {pipeline_mode = #tpu.pipeline_mode<synchronous>, transform_indices = @transform_5, window_bounds = array<i64: 128, 128>}, {pipeline_mode = #tpu.pipeline_mode<synchronous>, transform_indices = @transform_6, window_bounds = array<i64: 1, 128>}, {pipeline_mode = #tpu.pipeline_mode<synchronous>, transform_indices = @transform_7, window_bounds = array<i64: 128, 64>}, {pipeline_mode = #tpu.pipeline_mode<synchronous>, transform_indices = @transform_8, window_bounds = array<i64: 1, 64>}, {pipeline_mode = #tpu.pipeline_mode<synchronous>, transform_indices = @transform_9, window_bounds = array<i64: 64, 32>}, {pipeline_mode = #tpu.pipeline_mode<synchronous>, transform_indices = @transform_10, window_bounds = array<i64: 1, 32>}, {pipeline_mode = #tpu.pipeline_mode<synchronous>, transform_indices = @transform_11, window_bounds = array<i64: 32, 128>}, {pipeline_mode = #tpu.pipeline_mode<synchronous>, transform_indices = @transform_12, window_bounds = array<i64: 1, 128>}, {transform_indices = @transform_13, window_bounds = array<i64: 8, 128>}]} {
    %c0 = arith.constant 0 : index
    %c0_0 = arith.constant 0 : index
    %0 = vector.load %arg1[%c0, %c0_0] : memref<8x128xbf16, #tpu.memory_space<vmem>>, vector<8x128xbf16>
    %c0_1 = arith.constant 0 : index
    %c0_2 = arith.constant 0 : index
    %1 = vector.load %arg2[%c0_1, %c0_2] : memref<128x256xbf16, #tpu.memory_space<vmem>>, vector<128x256xbf16>
    %cst = arith.constant dense<0.000000e+00> : vector<8x256xf32>
    %2 = tpu.matmul %0, %1, %cst {dimension_numbers = #tpu.dot_dimension_numbers<[1], [0], [0], [1], [0, 0, 1, 1], [], []>} : vector<8x128xbf16>, vector<128x256xbf16>, vector<8x256xf32> -> vector<8x256xf32>
    %c0_3 = arith.constant 0 : index
    %c0_4 = arith.constant 0 : index
    %3 = vector.load %arg3[%c0_3, %c0_4] : memref<1x256xf32, #tpu.memory_space<vmem>>, vector<1x256xf32>
    %4 = vector.broadcast %3 : vector<1x256xf32> to vector<8x256xf32>
    %5 = arith.addf %2, %4 : vector<8x256xf32>
    %cst_5 = arith.constant 0.000000e+00 : f32
    %6 = vector.broadcast %cst_5 : f32 to vector<8x256xf32>
    %7 = arith.maximumf %5, %6 : vector<8x256xf32>
    %8 = arith.truncf %7 : vector<8x256xf32> to vector<8x256xbf16>
    %c0_6 = arith.constant 0 : index
    %c0_7 = arith.constant 0 : index
    %9 = vector.load %arg4[%c0_6, %c0_7] : memref<256x128xbf16, #tpu.memory_space<vmem>>, vector<256x128xbf16>
    %cst_8 = arith.constant dense<0.000000e+00> : vector<8x128xf32>
    %10 = tpu.matmul %8, %9, %cst_8 {dimension_numbers = #tpu.dot_dimension_numbers<[1], [0], [0], [1], [0, 0, 1, 1], [], []>} : vector<8x256xbf16>, vector<256x128xbf16>, vector<8x128xf32> -> vector<8x128xf32>
    %c0_9 = arith.constant 0 : index
    %c0_10 = arith.constant 0 : index
    %11 = vector.load %arg5[%c0_9, %c0_10] : memref<1x128xf32, #tpu.memory_space<vmem>>, vector<1x128xf32>
    %12 = vector.broadcast %11 : vector<1x128xf32> to vector<8x128xf32>
    %13 = arith.addf %10, %12 : vector<8x128xf32>
    %cst_11 = arith.constant 0.000000e+00 : f32
    %14 = vector.broadcast %cst_11 : f32 to vector<8x128xf32>
    %15 = arith.maximumf %13, %14 : vector<8x128xf32>
    %16 = arith.truncf %15 : vector<8x128xf32> to vector<8x128xbf16>
    %c0_12 = arith.constant 0 : index
    %c0_13 = arith.constant 0 : index
    %17 = vector.load %arg6[%c0_12, %c0_13] : memref<128x128xbf16, #tpu.memory_space<vmem>>, vector<128x128xbf16>
    %cst_14 = arith.constant dense<0.000000e+00> : vector<8x128xf32>
    %18 = tpu.matmul %16, %17, %cst_14 {dimension_numbers = #tpu.dot_dimension_numbers<[1], [0], [0], [1], [0, 0, 1, 1], [], []>} : vector<8x128xbf16>, vector<128x128xbf16>, vector<8x128xf32> -> vector<8x128xf32>
    %c0_15 = arith.constant 0 : index
    %c0_16 = arith.constant 0 : index
    %19 = vector.load %arg7[%c0_15, %c0_16] : memref<1x128xf32, #tpu.memory_space<vmem>>, vector<1x128xf32>
    %20 = vector.broadcast %19 : vector<1x128xf32> to vector<8x128xf32>
    %21 = arith.addf %18, %20 : vector<8x128xf32>
    %cst_17 = arith.constant 0.000000e+00 : f32
    %22 = vector.broadcast %cst_17 : f32 to vector<8x128xf32>
    %23 = arith.maximumf %21, %22 : vector<8x128xf32>
    %24 = arith.truncf %23 : vector<8x128xf32> to vector<8x128xbf16>
    %c0_18 = arith.constant 0 : index
    %c0_19 = arith.constant 0 : index
    %25 = vector.load %arg8[%c0_18, %c0_19] : memref<128x64xbf16, #tpu.memory_space<vmem>>, vector<128x64xbf16>
    %cst_20 = arith.constant dense<0.000000e+00> : vector<8x64xf32>
    %26 = tpu.matmul %24, %25, %cst_20 {dimension_numbers = #tpu.dot_dimension_numbers<[1], [0], [0], [1], [0, 0, 1, 1], [], []>} : vector<8x128xbf16>, vector<128x64xbf16>, vector<8x64xf32> -> vector<8x64xf32>
    %c0_21 = arith.constant 0 : index
    %c0_22 = arith.constant 0 : index
    %27 = vector.load %arg9[%c0_21, %c0_22] : memref<1x64xf32, #tpu.memory_space<vmem>>, vector<1x64xf32>
    %28 = vector.broadcast %27 : vector<1x64xf32> to vector<8x64xf32>
    %29 = arith.addf %26, %28 : vector<8x64xf32>
    %cst_23 = arith.constant 0.000000e+00 : f32
    %30 = vector.broadcast %cst_23 : f32 to vector<8x64xf32>
    %31 = arith.maximumf %29, %30 : vector<8x64xf32>
    %32 = arith.truncf %31 : vector<8x64xf32> to vector<8x64xbf16>
    %c0_24 = arith.constant 0 : index
    %c0_25 = arith.constant 0 : index
    %33 = vector.load %arg10[%c0_24, %c0_25] : memref<64x32xbf16, #tpu.memory_space<vmem>>, vector<64x32xbf16>
    %cst_26 = arith.constant dense<0.000000e+00> : vector<8x32xf32>
    %34 = tpu.matmul %32, %33, %cst_26 {dimension_numbers = #tpu.dot_dimension_numbers<[1], [0], [0], [1], [0, 0, 1, 1], [], []>} : vector<8x64xbf16>, vector<64x32xbf16>, vector<8x32xf32> -> vector<8x32xf32>
    %c0_27 = arith.constant 0 : index
    %c0_28 = arith.constant 0 : index
    %35 = vector.load %arg11[%c0_27, %c0_28] : memref<1x32xf32, #tpu.memory_space<vmem>>, vector<1x32xf32>
    %36 = vector.broadcast %35 : vector<1x32xf32> to vector<8x32xf32>
    %37 = arith.addf %34, %36 : vector<8x32xf32>
    %cst_29 = arith.constant 0.000000e+00 : f32
    %38 = vector.broadcast %cst_29 : f32 to vector<8x32xf32>
    %39 = arith.maximumf %37, %38 : vector<8x32xf32>
    %40 = arith.truncf %39 : vector<8x32xf32> to vector<8x32xbf16>
    %c0_30 = arith.constant 0 : index
    %c0_31 = arith.constant 0 : index
    %41 = vector.load %arg12[%c0_30, %c0_31] : memref<32x128xbf16, #tpu.memory_space<vmem>>, vector<32x128xbf16>
    %cst_32 = arith.constant dense<0.000000e+00> : vector<8x128xf32>
    %42 = tpu.matmul %40, %41, %cst_32 {dimension_numbers = #tpu.dot_dimension_numbers<[1], [0], [0], [1], [0, 0, 1, 1], [], []>} : vector<8x32xbf16>, vector<32x128xbf16>, vector<8x128xf32> -> vector<8x128xf32>
    %c0_33 = arith.constant 0 : index
    %c0_34 = arith.constant 0 : index
    %43 = vector.load %arg13[%c0_33, %c0_34] : memref<1x128xf32, #tpu.memory_space<vmem>>, vector<1x128xf32>
    %44 = vector.broadcast %43 : vector<1x128xf32> to vector<8x128xf32>
    %45 = arith.addf %42, %44 : vector<8x128xf32>
    %c0_35 = arith.constant 0 : index
    %c0_36 = arith.constant 0 : index
    %46 = vector.load %arg14[%c0_35, %c0_36] : memref<8x128xf32, #tpu.memory_space<vmem>>, vector<8x128xf32>
    tpu.vector_store %arg14[%c0_35, %c0_36], %45 {strides = array<i32>} : memref<8x128xf32, #tpu.memory_space<vmem>>, vector<8x128xf32>,
    return
  }
  func.func @transform_0(%arg0: i32) -> (i32, i32) {
    %c0_i32 = arith.constant 0 : i32
    %c0_i32_0 = arith.constant 0 : i32
    return %arg0, %c0_i32 : i32, i32
  }
  func.func @transform_1(%arg0: i32) -> (i32, i32) {
    %c0_i32 = arith.constant 0 : i32
    %c0_i32_0 = arith.constant 0 : i32
    %c0_i32_1 = arith.constant 0 : i32
    return %c0_i32, %c0_i32_0 : i32, i32
  }
  func.func @transform_2(%arg0: i32) -> (i32, i32) {
    %c0_i32 = arith.constant 0 : i32
    %c0_i32_0 = arith.constant 0 : i32
    %c0_i32_1 = arith.constant 0 : i32
    return %c0_i32, %c0_i32_0 : i32, i32
  }
  func.func @transform_3(%arg0: i32) -> (i32, i32) {
    %c0_i32 = arith.constant 0 : i32
    %c0_i32_0 = arith.constant 0 : i32
    %c0_i32_1 = arith.constant 0 : i32
    return %c0_i32, %c0_i32_0 : i32, i32
  }
  func.func @transform_4(%arg0: i32) -> (i32, i32) {
    %c0_i32 = arith.constant 0 : i32
    %c0_i32_0 = arith.constant 0 : i32
    %c0_i32_1 = arith.constant 0 : i32
    return %c0_i32, %c0_i32_0 : i32, i32
  }
  func.func @transform_5(%arg0: i32) -> (i32, i32) {
    %c0_i32 = arith.constant 0 : i32
    %c0_i32_0 = arith.constant 0 : i32
    %c0_i32_1 = arith.constant 0 : i32
    return %c0_i32, %c0_i32_0 : i32, i32
  }
  func.func @transform_6(%arg0: i32) -> (i32, i32) {
    %c0_i32 = arith.constant 0 : i32
    %c0_i32_0 = arith.constant 0 : i32
    %c0_i32_1 = arith.constant 0 : i32
    return %c0_i32, %c0_i32_0 : i32, i32
  }
  func.func @transform_7(%arg0: i32) -> (i32, i32) {
    %c0_i32 = arith.constant 0 : i32
    %c0_i32_0 = arith.constant 0 : i32
    %c0_i32_1 = arith.constant 0 : i32
    return %c0_i32, %c0_i32_0 : i32, i32
  }
  func.func @transform_8(%arg0: i32) -> (i32, i32) {
    %c0_i32 = arith.constant 0 : i32
    %c0_i32_0 = arith.constant 0 : i32
    %c0_i32_1 = arith.constant 0 : i32
    return %c0_i32, %c0_i32_0 : i32, i32
  }
  func.func @transform_9(%arg0: i32) -> (i32, i32) {
    %c0_i32 = arith.constant 0 : i32
    %c0_i32_0 = arith.constant 0 : i32
    %c0_i32_1 = arith.constant 0 : i32
    return %c0_i32, %c0_i32_0 : i32, i32
  }
  func.func @transform_10(%arg0: i32) -> (i32, i32) {
    %c0_i32 = arith.constant 0 : i32
    %c0_i32_0 = arith.constant 0 : i32
    %c0_i32_1 = arith.constant 0 : i32
    return %c0_i32, %c0_i32_0 : i32, i32
  }
  func.func @transform_11(%arg0: i32) -> (i32, i32) {
    %c0_i32 = arith.constant 0 : i32
    %c0_i32_0 = arith.constant 0 : i32
    %c0_i32_1 = arith.constant 0 : i32
    return %c0_i32, %c0_i32_0 : i32, i32
  }
  func.func @transform_12(%arg0: i32) -> (i32, i32) {
    %c0_i32 = arith.constant 0 : i32
    %c0_i32_0 = arith.constant 0 : i32
    %c0_i32_1 = arith.constant 0 : i32
    return %c0_i32, %c0_i32_0 : i32, i32
  }
  func.func @transform_13(%arg0: i32) -> (i32, i32) {
    %c0_i32 = arith.constant 0 : i32
    %c0_i32_0 = arith.constant 0 : i32
    return %arg0, %c0_i32 : i32, i32
  }
}

</mosaic_0001>

<llo_original>
// kernel: connect4net_forward.1
$region0: #{connect4net_forward.1}
  #allocation0 [shape = 'u32[]', space=smem, size = 0x4, offset = 0x4, fixed_abs, tag = 'smem constant byte address 0x4 - core index']
  #allocation1 [shape = 'u32[144,128]{1,0:T(1,128)}', space=vmem, size = 0x12000, scoped, tag = 'internal scratch']
  %s0 = inlined_call_operand.vmem [shape: bf16[8,128], index: 0, kind: input, shape index: {}]
  %s1 = inlined_call_operand.vmem [shape: bf16[128,256], index: 1, kind: input, shape index: {}]
  %s2 = inlined_call_operand.vmem [shape: f32[1,256], index: 2, kind: input, shape index: {}]
  %s3 = inlined_call_operand.vmem [shape: bf16[256,128], index: 3, kind: input, shape index: {}]
  %s4 = inlined_call_operand.vmem [shape: f32[1,128], index: 4, kind: input, shape index: {}]
  %s5 = inlined_call_operand.vmem [shape: bf16[128,128], index: 5, kind: input, shape index: {}]
  %s6 = inlined_call_operand.vmem [shape: f32[1,128], index: 6, kind: input, shape index: {}]
  %s7 = inlined_call_operand.vmem [shape: bf16[128,64], index: 7, kind: input, shape index: {}]
  %s8 = inlined_call_operand.vmem [shape: f32[1,64], index: 8, kind: input, shape index: {}]
  %s9 = inlined_call_operand.vmem [shape: bf16[64,32], index: 9, kind: input, shape index: {}]
  %s10 = inlined_call_operand.vmem [shape: f32[1,32], index: 10, kind: input, shape index: {}]
  %s11 = inlined_call_operand.vmem [shape: bf16[32,128], index: 11, kind: input, shape index: {}]
  %s12 = inlined_call_operand.vmem [shape: f32[1,128], index: 12, kind: input, shape index: {}]
  %s13 = inlined_call_operand.hbm [shape: f32[8,128], index: 13, kind: output, shape index: {}]
  %s14 = sld [smem:[#allocation0]]
  $region62: #{connect4net_forward.1} parent=0
    _
  %s16 = ssub.s32 1, %s14
  %s17 = scalar_select 0, %s16, %s14
  $region1: #{connect4net_forward.1} parent=0
    #allocation2 [shape = 'u8[4096]{0}', space=vmem, size = 0x1000, scoped, tag = 'output window, operand 0, single buffered']
    #allocation3 [shape = 's32[1]{0}', space=sflag, size = 0x4, scoped, tag = 'scoped memory for connect4net_forward.1']
    %18 = vsyncpa [#allocation3], 0
    // Predicated region
    $region2: #{connect4net_forward.1} parent=1 // pred_check
      _
    $region3: #{connect4net_forward.1} parent=1 // pred_check_branch
      %20 = sbr.rel (0) target = $region5
    $region4: #{connect4net_forward.1} parent=1 // pred_region
      _
    $region5: #{connect4net_forward.1} parent=1 // pred_fallthru
      _
    // Predicated region
    $region6: #{connect4net_forward.1} parent=1 // pred_check
      _
    $region7: #{connect4net_forward.1} parent=1 // pred_check_branch
      %22 = sbr.rel (0) target = $region9
    $region8: #{connect4net_forward.1} parent=1 // pred_region
      _
    $region9: #{connect4net_forward.1} parent=1 // pred_fallthru
      _
    // Predicated region
    $region10: #{connect4net_forward.1} parent=1 // pred_check
      _
    $region11: #{connect4net_forward.1} parent=1 // pred_check_branch
      %24 = sbr.rel (0) target = $region13
    $region12: #{connect4net_forward.1} parent=1 // pred_region
      _
    $region13: #{connect4net_forward.1} parent=1 // pred_fallthru
      _
    // Predicated region
    $region14: #{connect4net_forward.1} parent=1 // pred_check
      _
    $region15: #{connect4net_forward.1} parent=1 // pred_check_branch
      %26 = sbr.rel (0) target = $region17
    $region16: #{connect4net_forward.1} parent=1 // pred_region
      _
    $region17: #{connect4net_forward.1} parent=1 // pred_fallthru
      _
    // Predicated region
    $region18: #{connect4net_forward.1} parent=1 // pred_check
      _
    $region19: #{connect4net_forward.1} parent=1 // pred_check_branch
      %28 = sbr.rel (0) target = $region21
    $region20: #{connect4net_forward.1} parent=1 // pred_region
      _
    $region21: #{connect4net_forward.1} parent=1 // pred_fallthru
      _
    // Predicated region
    $region22: #{connect4net_forward.1} parent=1 // pred_check
      _
    $region23: #{connect4net_forward.1} parent=1 // pred_check_branch
      %30 = sbr.rel (0) target = $region25
    $region24: #{connect4net_forward.1} parent=1 // pred_region
      _
    $region25: #{connect4net_forward.1} parent=1 // pred_fallthru
      _
    // Predicated region
    $region26: #{connect4net_forward.1} parent=1 // pred_check
      _
    $region27: #{connect4net_forward.1} parent=1 // pred_check_branch
      %32 = sbr.rel (0) target = $region29
    $region28: #{connect4net_forward.1} parent=1 // pred_region
      _
    $region29: #{connect4net_forward.1} parent=1 // pred_fallthru
      _
    // Predicated region
    $region30: #{connect4net_forward.1} parent=1 // pred_check
      _
    $region31: #{connect4net_forward.1} parent=1 // pred_check_branch
      %34 = sbr.rel (0) target = $region33
    $region32: #{connect4net_forward.1} parent=1 // pred_region
      _
    $region33: #{connect4net_forward.1} parent=1 // pred_fallthru
      _
    // Predicated region
    $region34: #{connect4net_forward.1} parent=1 // pred_check
      _
    $region35: #{connect4net_forward.1} parent=1 // pred_check_branch
      %36 = sbr.rel (0) target = $region37
    $region36: #{connect4net_forward.1} parent=1 // pred_region
      _
    $region37: #{connect4net_forward.1} parent=1 // pred_fallthru
      _
    // Predicated region
    $region38: #{connect4net_forward.1} parent=1 // pred_check
      _
    $region39: #{connect4net_forward.1} parent=1 // pred_check_branch
      %38 = sbr.rel (0) target = $region41
    $region40: #{connect4net_forward.1} parent=1 // pred_region
      _
    $region41: #{connect4net_forward.1} parent=1 // pred_fallthru
      _
    // Predicated region
    $region42: #{connect4net_forward.1} parent=1 // pred_check
      _
    $region43: #{connect4net_forward.1} parent=1 // pred_check_branch
      %40 = sbr.rel (0) target = $region45
    $region44: #{connect4net_forward.1} parent=1 // pred_region
      _
    $region45: #{connect4net_forward.1} parent=1 // pred_fallthru
      _
    // Predicated region
    $region46: #{connect4net_forward.1} parent=1 // pred_check
      _
    $region47: #{connect4net_forward.1} parent=1 // pred_check_branch
      %42 = sbr.rel (0) target = $region49
    $region48: #{connect4net_forward.1} parent=1 // pred_region
      _
    $region49: #{connect4net_forward.1} parent=1 // pred_fallthru
      _
    // Predicated region
    $region50: #{connect4net_forward.1} parent=1 // pred_check
      _
    $region51: #{connect4net_forward.1} parent=1 // pred_check_branch
      %44 = sbr.rel (0) target = $region53
    $region52: #{connect4net_forward.1} parent=1 // pred_region
      _
    $region53: #{connect4net_forward.1} parent=1 // pred_fallthru
      _
    %v46 = vld [vmem:[%s0] sm:$0xf]
    %v47 = vld [vmem:[%s1] sm:$0xff]
    %v48 = vld [vmem:[%s1 + $0x8] sm:$0xff]
    %v49 = vld [vmem:[%s1 + $0x10] sm:$0xff]
    %v50 = vld [vmem:[%s1 + $0x18] sm:$0xff]
    %v51 = vld [vmem:[%s1 + $0x20] sm:$0xff]
    %v52 = vld [vmem:[%s1 + $0x28] sm:$0xff]
    %v53 = vld [vmem:[%s1 + $0x30] sm:$0xff]
    %v54 = vld [vmem:[%s1 + $0x38] sm:$0xff]
    %v55 = vld [vmem:[%s1 + $0x40] sm:$0xff]
    %v56 = vld [vmem:[%s1 + $0x48] sm:$0xff]
    %v57 = vld [vmem:[%s1 + $0x50] sm:$0xff]
    %v58 = vld [vmem:[%s1 + $0x58] sm:$0xff]
    %v59 = vld [vmem:[%s1 + $0x60] sm:$0xff]
    %v60 = vld [vmem:[%s1 + $0x68] sm:$0xff]
    %v61 = vld [vmem:[%s1 + $0x70] sm:$0xff]
    %v62 = vld [vmem:[%s1 + $0x78] sm:$0xff]
    %v63 = vld [vmem:[%s2] sm:$0x3]
    %v65 = vlaneseq
    %v66 = vshrl.u32 %v65, 7
    %v67 = vsub.s32 0, %v66
    %v68 = vrot.slane %v63, %v67
    %v69 = vlaneseq
    %v70 = vshrl.u32 %v69, 7
    %v71 = vsub.s32 1, %v70
    %v72 = vrot.slane %v63, %v71
    %v91 = vunpack.c.l.b16 %v47
    %v92 = vunpack.c.h.b16 %v47
    %v93 = vunpack.c.l.b16 %v48
    %v94 = vunpack.c.h.b16 %v48
    %v95 = vunpack.c.l.b16 %v49
    %v96 = vunpack.c.h.b16 %v49
    %v97 = vunpack.c.l.b16 %v50
    %v98 = vunpack.c.h.b16 %v50
    %v99 = vunpack.c.l.b16 %v51
    %v100 = vunpack.c.h.b16 %v51
    %v101 = vunpack.c.l.b16 %v52
    %v102 = vunpack.c.h.b16 %v52
    %v103 = vunpack.c.l.b16 %v53
    %v104 = vunpack.c.h.b16 %v53
    %v105 = vunpack.c.l.b16 %v54
    %v106 = vunpack.c.h.b16 %v54
    %v107 = vunpack.c.l.b16 %v55
    %v108 = vunpack.c.h.b16 %v55
    %v109 = vunpack.c.l.b16 %v56
    %v110 = vunpack.c.h.b16 %v56
    %v111 = vunpack.c.l.b16 %v57
    %v112 = vunpack.c.h.b16 %v57
    %v113 = vunpack.c.l.b16 %v58
    %v114 = vunpack.c.h.b16 %v58
    %v115 = vunpack.c.l.b16 %v59
    %v116 = vunpack.c.h.b16 %v59
    %v117 = vunpack.c.l.b16 %v60
    %v118 = vunpack.c.h.b16 %v60
    %v119 = vunpack.c.l.b16 %v61
    %v120 = vunpack.c.h.b16 %v61
    %v121 = vunpack.c.l.b16 %v62
    %v122 = vunpack.c.h.b16 %v62
    %v123 = vpack.c.b16 %v93, %v91
    %v124 = vpack.c.b16 %v94, %v92
    %v125 = vpack.c.b16 %v97, %v95
    %v126 = vpack.c.b16 %v98, %v96
    %v127 = vpack.c.b16 %v101, %v99
    %v128 = vpack.c.b16 %v102, %v100
    %v129 = vpack.c.b16 %v105, %v103
    %v130 = vpack.c.b16 %v106, %v104
    %v131 = vpack.c.b16 %v109, %v107
    %v132 = vpack.c.b16 %v110, %v108
    %v133 = vpack.c.b16 %v113, %v111
    %v134 = vpack.c.b16 %v114, %v112
    %v135 = vpack.c.b16 %v117, %v115
    %v136 = vpack.c.b16 %v118, %v116
    %v137 = vpack.c.b16 %v121, %v119
    %v138 = vpack.c.b16 %v122, %v120
    %155 = vmatprep.subr.bf16.mxu0 %v138
    %156 = vmatpush1.bf16.msra.mxu0 %v137
    %157 = vmatprep.subr.bf16.mxu0 %v136
    %158 = vmatpush1.bf16.msra.mxu0 %v135
    %159 = vmatprep.subr.bf16.mxu0 %v134
    %160 = vmatpush1.bf16.msra.mxu0 %v133
    %161 = vmatprep.subr.bf16.mxu0 %v132
    %162 = vmatpush1.bf16.msra.mxu0 %v131
    %163 = vmatprep.subr.bf16.mxu0 %v130
    %164 = vmatpush1.bf16.msra.mxu0 %v129
    %165 = vmatprep.subr.bf16.mxu0 %v128
    %166 = vmatpush1.bf16.msra.mxu0 %v127
    %167 = vmatprep.subr.bf16.mxu0 %v126
    %168 = vmatpush1.bf16.msra.mxu0 %v125
    %169 = vmatprep.subr.bf16.mxu0 %v124
    %170 = vmatpush1.bf16.msra.mxu0 %v123
    %171 = vmatprep.subr.bf16.mxu0 0
    %172 = vmatpush2.bf16.msra.mxu0 0
    %173 = vmatprep.subr.bf16.mxu0 0
    %174 = vmatpush2.bf16.msra.mxu0 0
    %175 = vmatprep.subr.bf16.mxu0 0
    %176 = vmatpush2.bf16.msra.mxu0 0
    %177 = vmatprep.subr.bf16.mxu0 0
    %178 = vmatpush2.bf16.msra.mxu0 0
    %179 = vmatprep.subr.bf16.mxu0 0
    %180 = vmatpush2.bf16.msra.mxu0 0
    %181 = vmatprep.subr.bf16.mxu0 0
    %182 = vmatpush2.bf16.msra.mxu0 0
    %183 = vmatprep.subr.bf16.mxu0 0
    %184 = vmatpush2.bf16.msra.mxu0 0
    %185 = vmatprep.subr.bf16.mxu0 0
    %186 = vmatpush2.bf16.msra.mxu0 0
    %187 = vmatprep.mubr.bf16.mxu0 0
    %188 = vmatmul.mubr.bf16.gmra.mxu0 %v46
    %v189 = vpop.f32.mrf.mxu0
    %v190 = vadd.f32 %v68, %v189
    %v191 = vpop.f32.mrf.mxu0
    %v192 = vadd.f32 %v72, %v191
    %v193 = vpop.f32.mrf.mxu0
    %v194 = vpop.f32.mrf.mxu0
    %195 = vdwg.mxu0
    %v196 = vmax.f32 %v190, 0.0
    %v197 = vmax.f32 %v192, 0.0
    %v198 = vpack.c.bf16 %v196, %v196
    %v199 = vpack.c.bf16 %v197, %v197
    %v200 = vld [vmem:[%s3] sm:$0xf]
    %v201 = vld [vmem:[%s3 + $0x4] sm:$0xf]
    %v202 = vld [vmem:[%s3 + $0x8] sm:$0xf]
    %v203 = vld [vmem:[%s3 + $0xc] sm:$0xf]
    %v204 = vld [vmem:[%s3 + $0x10] sm:$0xf]
    %v205 = vld [vmem:[%s3 + $0x14] sm:$0xf]
    %v206 = vld [vmem:[%s3 + $0x18] sm:$0xf]
    %v207 = vld [vmem:[%s3 + $0x1c] sm:$0xf]
    %v208 = vld [vmem:[%s3 + $0x20] sm:$0xf]
    %v209 = vld [vmem:[%s3 + $0x24] sm:$0xf]
    %v210 = vld [vmem:[%s3 + $0x28] sm:$0xf]
    %v211 = vld [vmem:[%s3 + $0x2c] sm:$0xf]
    %v212 = vld [vmem:[%s3 + $0x30] sm:$0xf]
    %v213 = vld [vmem:[%s3 + $0x34] sm:$0xf]
    %v214 = vld [vmem:[%s3 + $0x38] sm:$0xf]
    %v215 = vld [vmem:[%s3 + $0x3c] sm:$0xf]
    %v216 = vld [vmem:[%s3 + $0x40] sm:$0xf]
    %v217 = vld [vmem:[%s3 + $0x44] sm:$0xf]
    %v218 = vld [vmem:[%s3 + $0x48] sm:$0xf]
    %v219 = vld [vmem:[%s3 + $0x4c] sm:$0xf]
    %v220 = vld [vmem:[%s3 + $0x50] sm:$0xf]
    %v221 = vld [vmem:[%s3 + $0x54] sm:$0xf]
    %v222 = vld [vmem:[%s3 + $0x58] sm:$0xf]
    %v223 = vld [vmem:[%s3 + $0x5c] sm:$0xf]
    %v224 = vld [vmem:[%s3 + $0x60] sm:$0xf]
    %v225 = vld [vmem:[%s3 + $0x64] sm:$0xf]
    %v226 = vld [vmem:[%s3 + $0x68] sm:$0xf]
    %v227 = vld [vmem:[%s3 + $0x6c] sm:$0xf]
    %v228 = vld [vmem:[%s3 + $0x70] sm:$0xf]
    %v229 = vld [vmem:[%s3 + $0x74] sm:$0xf]
    %v230 = vld [vmem:[%s3 + $0x78] sm:$0xf]
    %v231 = vld [vmem:[%s3 + $0x7c] sm:$0xf]
    %v232 = vld [vmem:[%s4] sm:$0x1]
    %v234 = vlaneseq
    %v235 = vshrl.u32 %v234, 7
    %v236 = vsub.s32 0, %v235
    %v237 = vrot.slane %v232, %v236
    %v271 = vunpack.c.l.b16 %v200
    %v272 = vunpack.c.l.b16 %v201
    %v273 = vunpack.c.l.b16 %v202
    %v274 = vunpack.c.l.b16 %v203
    %v275 = vunpack.c.l.b16 %v204
    %v276 = vunpack.c.l.b16 %v205
    %v277 = vunpack.c.l.b16 %v206
    %v278 = vunpack.c.l.b16 %v207
    %v279 = vunpack.c.l.b16 %v208
    %v280 = vunpack.c.l.b16 %v209
    %v281 = vunpack.c.l.b16 %v210
    %v282 = vunpack.c.l.b16 %v211
    %v283 = vunpack.c.l.b16 %v212
    %v284 = vunpack.c.l.b16 %v213
    %v285 = vunpack.c.l.b16 %v214
    %v286 = vunpack.c.l.b16 %v215
    %v287 = vunpack.c.l.b16 %v216
    %v288 = vunpack.c.l.b16 %v217
    %v289 = vunpack.c.l.b16 %v218
    %v290 = vunpack.c.l.b16 %v219
    %v291 = vunpack.c.l.b16 %v220
    %v292 = vunpack.c.l.b16 %v221
    %v293 = vunpack.c.l.b16 %v222
    %v294 = vunpack.c.l.b16 %v223
    %v295 = vunpack.c.l.b16 %v224
    %v296 = vunpack.c.l.b16 %v225
    %v297 = vunpack.c.l.b16 %v226
    %v298 = vunpack.c.l.b16 %v227
    %v299 = vunpack.c.l.b16 %v228
    %v300 = vunpack.c.l.b16 %v229
    %v301 = vunpack.c.l.b16 %v230
    %v302 = vunpack.c.l.b16 %v231
    %v303 = vpack.c.b16 %v272, %v271
    %v304 = vpack.c.b16 %v274, %v273
    %v305 = vpack.c.b16 %v276, %v275
    %v306 = vpack.c.b16 %v278, %v277
    %v307 = vpack.c.b16 %v280, %v279
    %v308 = vpack.c.b16 %v282, %v281
    %v309 = vpack.c.b16 %v284, %v283
    %v310 = vpack.c.b16 %v286, %v285
    %v311 = vpack.c.b16 %v288, %v287
    %v312 = vpack.c.b16 %v290, %v289
    %v313 = vpack.c.b16 %v292, %v291
    %v314 = vpack.c.b16 %v294, %v293
    %v315 = vpack.c.b16 %v296, %v295
    %v316 = vpack.c.b16 %v298, %v297
    %v317 = vpack.c.b16 %v300, %v299
    %v318 = vpack.c.b16 %v302, %v301
    %335 = vmatprep.subr.bf16.mxu0 0
    %336 = vmatpush1.bf16.msra.mxu0 %v310
    %337 = vmatprep.subr.bf16.mxu0 0
    %338 = vmatpush1.bf16.msra.mxu0 %v309
    %339 = vmatprep.subr.bf16.mxu0 0
    %340 = vmatpush1.bf16.msra.mxu0 %v308
    %341 = vmatprep.subr.bf16.mxu0 0
    %342 = vmatpush1.bf16.msra.mxu0 %v307
    %343 = vmatprep.subr.bf16.mxu0 0
    %344 = vmatpush1.bf16.msra.mxu0 %v306
    %345 = vmatprep.subr.bf16.mxu0 0
    %346 = vmatpush1.bf16.msra.mxu0 %v305
    %347 = vmatprep.subr.bf16.mxu0 0
    %348 = vmatpush1.bf16.msra.mxu0 %v304
    %349 = vmatprep.subr.bf16.mxu0 0
    %350 = vmatpush1.bf16.msra.mxu0 %v303
    %351 = vmatprep.subr.bf16.mxu0 0
    %352 = vmatpush2.bf16.msra.mxu0 %v318
    %353 = vmatprep.subr.bf16.mxu0 0
    %354 = vmatpush2.bf16.msra.mxu0 %v317
    %355 = vmatprep.subr.bf16.mxu0 0
    %356 = vmatpush2.bf16.msra.mxu0 %v316
    %357 = vmatprep.subr.bf16.mxu0 0
    %358 = vmatpush2.bf16.msra.mxu0 %v315
    %359 = vmatprep.subr.bf16.mxu0 0
    %360 = vmatpush2.bf16.msra.mxu0 %v314
    %361 = vmatprep.subr.bf16.mxu0 0
    %362 = vmatpush2.bf16.msra.mxu0 %v313
    %363 = vmatprep.subr.bf16.mxu0 0
    %364 = vmatpush2.bf16.msra.mxu0 %v312
    %365 = vmatprep.subr.bf16.mxu0 0
    %366 = vmatpush2.bf16.msra.mxu0 %v311
    %367 = vmatprep.mubr.bf16.mxu0 %v199
    %368 = vmatmul.mubr.bf16.gmra.mxu0 %v198
    %v369 = vpop.f32.mrf.mxu0
    %v370 = vadd.f32 %v237, %v369
    %v371 = vpop.f32.mrf.mxu0
    %v372 = vpop.f32.mrf.mxu0
    %v373 = vpop.f32.mrf.mxu0
    %374 = vdwg.mxu0
    %v375 = vmax.f32 %v370, 0.0
    %v376 = vpack.c.bf16 %v375, %v375
    %v377 = vld [vmem:[%s5] sm:$0xf]
    %v378 = vld [vmem:[%s5 + $0x4] sm:$0xf]
    %v379 = vld [vmem:[%s5 + $0x8] sm:$0xf]
    %v380 = vld [vmem:[%s5 + $0xc] sm:$0xf]
    %v381 = vld [vmem:[%s5 + $0x10] sm:$0xf]
    %v382 = vld [vmem:[%s5 + $0x14] sm:$0xf]
    %v383 = vld [vmem:[%s5 + $0x18] sm:$0xf]
    %v384 = vld [vmem:[%s5 + $0x1c] sm:$0xf]
    %v385 = vld [vmem:[%s5 + $0x20] sm:$0xf]
    %v386 = vld [vmem:[%s5 + $0x24] sm:$0xf]
    %v387 = vld [vmem:[%s5 + $0x28] sm:$0xf]
    %v388 = vld [vmem:[%s5 + $0x2c] sm:$0xf]
    %v389 = vld [vmem:[%s5 + $0x30] sm:$0xf]
    %v390 = vld [vmem:[%s5 + $0x34] sm:$0xf]
    %v391 = vld [vmem:[%s5 + $0x38] sm:$0xf]
    %v392 = vld [vmem:[%s5 + $0x3c] sm:$0xf]
    %v393 = vld [vmem:[%s6] sm:$0x1]
    %v395 = vlaneseq
    %v396 = vshrl.u32 %v395, 7
    %v397 = vsub.s32 0, %v396
    %v398 = vrot.slane %v393, %v397
    %v416 = vunpack.c.l.b16 %v377
    %v417 = vunpack.c.l.b16 %v378
    %v418 = vunpack.c.l.b16 %v379
    %v419 = vunpack.c.l.b16 %v380
    %v420 = vunpack.c.l.b16 %v381
    %v421 = vunpack.c.l.b16 %v382
    %v422 = vunpack.c.l.b16 %v383
    %v423 = vunpack.c.l.b16 %v384
    %v424 = vunpack.c.l.b16 %v385
    %v425 = vunpack.c.l.b16 %v386
    %v426 = vunpack.c.l.b16 %v387
    %v427 = vunpack.c.l.b16 %v388
    %v428 = vunpack.c.l.b16 %v389
    %v429 = vunpack.c.l.b16 %v390
    %v430 = vunpack.c.l.b16 %v391
    %v431 = vunpack.c.l.b16 %v392
    %v432 = vpack.c.b16 %v417, %v416
    %v433 = vpack.c.b16 %v419, %v418
    %v434 = vpack.c.b16 %v421, %v420
    %v435 = vpack.c.b16 %v423, %v422
    %v436 = vpack.c.b16 %v425, %v424
    %v437 = vpack.c.b16 %v427, %v426
    %v438 = vpack.c.b16 %v429, %v428
    %v439 = vpack.c.b16 %v431, %v430
    %448 = vmatprep.subr.bf16.mxu0 0
    %449 = vmatpush1.bf16.msra.mxu0 %v439
    %450 = vmatprep.subr.bf16.mxu0 0
    %451 = vmatpush1.bf16.msra.mxu0 %v438
    %452 = vmatprep.subr.bf16.mxu0 0
    %453 = vmatpush1.bf16.msra.mxu0 %v437
    %454 = vmatprep.subr.bf16.mxu0 0
    %455 = vmatpush1.bf16.msra.mxu0 %v436
    %456 = vmatprep.subr.bf16.mxu0 0
    %457 = vmatpush1.bf16.msra.mxu0 %v435
    %458 = vmatprep.subr.bf16.mxu0 0
    %459 = vmatpush1.bf16.msra.mxu0 %v434
    %460 = vmatprep.subr.bf16.mxu0 0
    %461 = vmatpush1.bf16.msra.mxu0 %v433
    %462 = vmatprep.subr.bf16.mxu0 0
    %463 = vmatpush1.bf16.msra.mxu0 %v432
    %464 = vmatprep.subr.bf16.mxu0 0
    %465 = vmatpush2.bf16.msra.mxu0 0
    %466 = vmatprep.subr.bf16.mxu0 0
    %467 = vmatpush2.bf16.msra.mxu0 0
    %468 = vmatprep.subr.bf16.mxu0 0
    %469 = vmatpush2.bf16.msra.mxu0 0
    %470 = vmatprep.subr.bf16.mxu0 0
    %471 = vmatpush2.bf16.msra.mxu0 0
    %472 = vmatprep.subr.bf16.mxu0 0
    %473 = vmatpush2.bf16.msra.mxu0 0
    %474 = vmatprep.subr.bf16.mxu0 0
    %475 = vmatpush2.bf16.msra.mxu0 0
    %476 = vmatprep.subr.bf16.mxu0 0
    %477 = vmatpush2.bf16.msra.mxu0 0
    %478 = vmatprep.subr.bf16.mxu0 0
    %479 = vmatpush2.bf16.msra.mxu0 0
    %480 = vmatprep.mubr.bf16.mxu0 0
    %481 = vmatmul.mubr.bf16.gmra.mxu0 %v376
    %v482 = vpop.f32.mrf.mxu0
    %v483 = vadd.f32 %v398, %v482
    %v484 = vpop.f32.mrf.mxu0
    %v485 = vpop.f32.mrf.mxu0
    %v486 = vpop.f32.mrf.mxu0
    %487 = vdwg.mxu0
    %v488 = vmax.f32 %v483, 0.0
    %v489 = vpack.c.bf16 %v488, %v488
    %v490 = vld [vmem:[%s7] sm:$0xf]
    %v491 = vld [vmem:[%s7 + $0x4] sm:$0xf]
    %v492 = vld [vmem:[%s7 + $0x8] sm:$0xf]
    %v493 = vld [vmem:[%s7 + $0xc] sm:$0xf]
    %v494 = vld [vmem:[%s7 + $0x10] sm:$0xf]
    %v495 = vld [vmem:[%s7 + $0x14] sm:$0xf]
    %v496 = vld [vmem:[%s7 + $0x18] sm:$0xf]
    %v497 = vld [vmem:[%s7 + $0x1c] sm:$0xf]
    %v498 = vld [vmem:[%s7 + $0x20] sm:$0xf]
    %v499 = vld [vmem:[%s7 + $0x24] sm:$0xf]
    %v500 = vld [vmem:[%s7 + $0x28] sm:$0xf]
    %v501 = vld [vmem:[%s7 + $0x2c] sm:$0xf]
    %v502 = vld [vmem:[%s7 + $0x30] sm:$0xf]
    %v503 = vld [vmem:[%s7 + $0x34] sm:$0xf]
    %v504 = vld [vmem:[%s7 + $0x38] sm:$0xf]
    %v505 = vld [vmem:[%s7 + $0x3c] sm:$0xf]
    %v506 = vld [vmem:[%s8] sm:$0x1]
    %v508 = vlaneseq
    %v509 = vshrl.u32 %v508, 7
    %v510 = vsub.s32 0, %v509
    %v511 = vrot.slane %v506, %v510
    %v529 = vunpack.c.l.b16 %v490
    %v530 = vunpack.c.l.b16 %v491
    %v531 = vunpack.c.l.b16 %v492
    %v532 = vunpack.c.l.b16 %v493
    %v533 = vunpack.c.l.b16 %v494
    %v534 = vunpack.c.l.b16 %v495
    %v535 = vunpack.c.l.b16 %v496
    %v536 = vunpack.c.l.b16 %v497
    %v537 = vunpack.c.l.b16 %v498
    %v538 = vunpack.c.l.b16 %v499
    %v539 = vunpack.c.l.b16 %v500
    %v540 = vunpack.c.l.b16 %v501
    %v541 = vunpack.c.l.b16 %v502
    %v542 = vunpack.c.l.b16 %v503
    %v543 = vunpack.c.l.b16 %v504
    %v544 = vunpack.c.l.b16 %v505
    %v545 = vpack.c.b16 %v530, %v529
    %v546 = vpack.c.b16 %v532, %v531
    %v547 = vpack.c.b16 %v534, %v533
    %v548 = vpack.c.b16 %v536, %v535
    %v549 = vpack.c.b16 %v538, %v537
    %v550 = vpack.c.b16 %v540, %v539
    %v551 = vpack.c.b16 %v542, %v541
    %v552 = vpack.c.b16 %v544, %v543
    %561 = vmatprep.subr.bf16.mxu0 0
    %562 = vmatpush1.bf16.msra.mxu0 %v552
    %563 = vmatprep.subr.bf16.mxu0 0
    %564 = vmatpush1.bf16.msra.mxu0 %v551
    %565 = vmatprep.subr.bf16.mxu0 0
    %566 = vmatpush1.bf16.msra.mxu0 %v550
    %567 = vmatprep.subr.bf16.mxu0 0
    %568 = vmatpush1.bf16.msra.mxu0 %v549
    %569 = vmatprep.subr.bf16.mxu0 0
    %570 = vmatpush1.bf16.msra.mxu0 %v548
    %571 = vmatprep.subr.bf16.mxu0 0
    %572 = vmatpush1.bf16.msra.mxu0 %v547
    %573 = vmatprep.subr.bf16.mxu0 0
    %574 = vmatpush1.bf16.msra.mxu0 %v546
    %575 = vmatprep.subr.bf16.mxu0 0
    %576 = vmatpush1.bf16.msra.mxu0 %v545
    %577 = vmatprep.subr.bf16.mxu0 0
    %578 = vmatpush2.bf16.msra.mxu0 0
    %579 = vmatprep.subr.bf16.mxu0 0
    %580 = vmatpush2.bf16.msra.mxu0 0
    %581 = vmatprep.subr.bf16.mxu0 0
    %582 = vmatpush2.bf16.msra.mxu0 0
    %583 = vmatprep.subr.bf16.mxu0 0
    %584 = vmatpush2.bf16.msra.mxu0 0
    %585 = vmatprep.subr.bf16.mxu0 0
    %586 = vmatpush2.bf16.msra.mxu0 0
    %587 = vmatprep.subr.bf16.mxu0 0
    %588 = vmatpush2.bf16.msra.mxu0 0
    %589 = vmatprep.subr.bf16.mxu0 0
    %590 = vmatpush2.bf16.msra.mxu0 0
    %591 = vmatprep.subr.bf16.mxu0 0
    %592 = vmatpush2.bf16.msra.mxu0 0
    %593 = vmatprep.mubr.bf16.mxu0 0
    %594 = vmatmul.mubr.bf16.gmra.mxu0 %v489
    %v595 = vpop.f32.mrf.mxu0
    %v596 = vadd.f32 %v511, %v595
    %v597 = vpop.f32.mrf.mxu0
    %v598 = vpop.f32.mrf.mxu0
    %v599 = vpop.f32.mrf.mxu0
    %600 = vdwg.mxu0
    %v601 = vmax.f32 %v596, 0.0
    %v602 = vpack.c.bf16 %v601, %v601
    %v603 = vld [vmem:[%s9] sm:$0xf]
    %v604 = vld [vmem:[%s9 + $0x4] sm:$0xf]
    %v605 = vld [vmem:[%s9 + $0x8] sm:$0xf]
    %v606 = vld [vmem:[%s9 + $0xc] sm:$0xf]
    %v607 = vld [vmem:[%s9 + $0x10] sm:$0xf]
    %v608 = vld [vmem:[%s9 + $0x14] sm:$0xf]
    %v609 = vld [vmem:[%s9 + $0x18] sm:$0xf]
    %v610 = vld [vmem:[%s9 + $0x1c] sm:$0xf]
    %v611 = vld [vmem:[%s10] sm:$0x1]
    %v613 = vlaneseq
    %v614 = vshrl.u32 %v613, 7
    %v615 = vsub.s32 0, %v614
    %v616 = vrot.slane %v611, %v615
    %v626 = vunpack.c.l.b16 %v603
    %v627 = vunpack.c.l.b16 %v604
    %v628 = vunpack.c.l.b16 %v605
    %v629 = vunpack.c.l.b16 %v606
    %v630 = vunpack.c.l.b16 %v607
    %v631 = vunpack.c.l.b16 %v608
    %v632 = vunpack.c.l.b16 %v609
    %v633 = vunpack.c.l.b16 %v610
    %v634 = vpack.c.b16 %v627, %v626
    %v635 = vpack.c.b16 %v629, %v628
    %v636 = vpack.c.b16 %v631, %v630
    %v637 = vpack.c.b16 %v633, %v632
    %vm642 = vcmask 523264
    %v644 = vsel %vm642, %v602, 0
    %646 = vmatprep.subr.bf16.mxu0 0
    %647 = vmatpush1.bf16.msra.mxu0 0
    %648 = vmatprep.subr.bf16.mxu0 0
    %649 = vmatpush1.bf16.msra.mxu0 0
    %650 = vmatprep.subr.bf16.mxu0 0
    %651 = vmatpush1.bf16.msra.mxu0 0
    %652 = vmatprep.subr.bf16.mxu0 0
    %653 = vmatpush1.bf16.msra.mxu0 0
    %654 = vmatprep.subr.bf16.mxu0 0
    %655 = vmatpush1.bf16.msra.mxu0 %v637
    %656 = vmatprep.subr.bf16.mxu0 0
    %657 = vmatpush1.bf16.msra.mxu0 %v636
    %658 = vmatprep.subr.bf16.mxu0 0
    %659 = vmatpush1.bf16.msra.mxu0 %v635
    %660 = vmatprep.subr.bf16.mxu0 0
    %661 = vmatpush1.bf16.msra.mxu0 %v634
    %662 = vmatprep.subr.bf16.mxu0 0
    %663 = vmatpush2.bf16.msra.mxu0 0
    %664 = vmatprep.subr.bf16.mxu0 0
    %665 = vmatpush2.bf16.msra.mxu0 0
    %666 = vmatprep.subr.bf16.mxu0 0
    %667 = vmatpush2.bf16.msra.mxu0 0
    %668 = vmatprep.subr.bf16.mxu0 0
    %669 = vmatpush2.bf16.msra.mxu0 0
    %670 = vmatprep.subr.bf16.mxu0 0
    %671 = vmatpush2.bf16.msra.mxu0 0
    %672 = vmatprep.subr.bf16.mxu0 0
    %673 = vmatpush2.bf16.msra.mxu0 0
    %674 = vmatprep.subr.bf16.mxu0 0
    %675 = vmatpush2.bf16.msra.mxu0 0
    %676 = vmatprep.subr.bf16.mxu0 0
    %677 = vmatpush2.bf16.msra.mxu0 0
    %678 = vmatprep.mubr.bf16.mxu0 0
    %679 = vmatmul.mubr.bf16.gmra.mxu0 %v644
    %v680 = vpop.f32.mrf.mxu0
    %v681 = vadd.f32 %v616, %v680
    %v682 = vpop.f32.mrf.mxu0
    %v683 = vpop.f32.mrf.mxu0
    %v684 = vpop.f32.mrf.mxu0
    %685 = vdwg.mxu0
    %v686 = vmax.f32 %v681, 0.0
    %v687 = vpack.c.bf16 %v686, %v686
    %v688 = vld [vmem:[%s11] sm:$0xf]
    %v689 = vld [vmem:[%s11 + $0x4] sm:$0xf]
    %v690 = vld [vmem:[%s11 + $0x8] sm:$0xf]
    %v691 = vld [vmem:[%s11 + $0xc] sm:$0xf]
    %v692 = vld [vmem:[%s12] sm:$0x1]
    %v694 = vlaneseq
    %v695 = vshrl.u32 %v694, 7
    %v696 = vsub.s32 0, %v695
    %v697 = vrot.slane %v692, %v696
    %v703 = vunpack.c.l.b16 %v688
    %v704 = vunpack.c.l.b16 %v689
    %v705 = vunpack.c.l.b16 %v690
    %v706 = vunpack.c.l.b16 %v691
    %v707 = vpack.c.b16 %v704, %v703
    %v708 = vpack.c.b16 %v706, %v705
    %vm711 = vcmask 261120
    %v713 = vsel %vm711, %v687, 0
    %715 = vmatprep.subr.bf16.mxu0 0
    %716 = vmatpush1.bf16.msra.mxu0 0
    %717 = vmatprep.subr.bf16.mxu0 0
    %718 = vmatpush1.bf16.msra.mxu0 0
    %719 = vmatprep.subr.bf16.mxu0 0
    %720 = vmatpush1.bf16.msra.mxu0 0
    %721 = vmatprep.subr.bf16.mxu0 0
    %722 = vmatpush1.bf16.msra.mxu0 0
    %723 = vmatprep.subr.bf16.mxu0 0
    %724 = vmatpush1.bf16.msra.mxu0 0
    %725 = vmatprep.subr.bf16.mxu0 0
    %726 = vmatpush1.bf16.msra.mxu0 0
    %727 = vmatprep.subr.bf16.mxu0 0
    %728 = vmatpush1.bf16.msra.mxu0 %v708
    %729 = vmatprep.subr.bf16.mxu0 0
    %730 = vmatpush1.bf16.msra.mxu0 %v707
    %731 = vmatprep.subr.bf16.mxu0 0
    %732 = vmatpush2.bf16.msra.mxu0 0
    %733 = vmatprep.subr.bf16.mxu0 0
    %734 = vmatpush2.bf16.msra.mxu0 0
    %735 = vmatprep.subr.bf16.mxu0 0
    %736 = vmatpush2.bf16.msra.mxu0 0
    %737 = vmatprep.subr.bf16.mxu0 0
    %738 = vmatpush2.bf16.msra.mxu0 0
    %739 = vmatprep.subr.bf16.mxu0 0
    %740 = vmatpush2.bf16.msra.mxu0 0
    %741 = vmatprep.subr.bf16.mxu0 0
    %742 = vmatpush2.bf16.msra.mxu0 0
    %743 = vmatprep.subr.bf16.mxu0 0
    %744 = vmatpush2.bf16.msra.mxu0 0
    %745 = vmatprep.subr.bf16.mxu0 0
    %746 = vmatpush2.bf16.msra.mxu0 0
    %747 = vmatprep.mubr.bf16.mxu0 0
    %748 = vmatmul.mubr.bf16.gmra.mxu0 %v713
    %v749 = vpop.f32.mrf.mxu0
    %v750 = vadd.f32 %v697, %v749
    %v751 = vpop.f32.mrf.mxu0
    %v752 = vpop.f32.mrf.mxu0
    %v753 = vpop.f32.mrf.mxu0
    %754 = vdwg.mxu0
    %755 = vst [vmem:[#allocation2] sm:$0xff] %v750
    // Predicated region
    $region54: #{connect4net_forward.1} parent=1 // pred_check
      _
    $region55: #{connect4net_forward.1} parent=1 // pred_check_branch
      %757 = sbr.rel (0) target = $region57
    $region56: #{connect4net_forward.1} parent=1 // pred_region
      %s759 = ssub.s32 128, 128
      %760 = vsyncadd [#allocation3], %s759
      %s762 = sshll.u32 [#allocation2], 4
      %s763 = int_to_ptr.vmem [resolvable:$true] %s762
      %765 = dma.vmem_to_hbm [thread:$0]  %s763, 128, %s13, [#allocation3]
    $region57: #{connect4net_forward.1} parent=1 // pred_fallthru
      _
    // Predicated region
    $region58: #{connect4net_forward.1} parent=1 // pred_check
      _
    $region59: #{connect4net_forward.1} parent=1 // pred_check_branch
      %767 = sbr.rel (0) target = $region61
    $region60: #{connect4net_forward.1} parent=1 // pred_region
      %768 = dma.done [#allocation3], 128
    $region61: #{connect4net_forward.1} parent=1 // pred_fallthru
      _
    %769 = vsyncpa [#allocation3], 1

</llo_original>
